<compile_context>
chip_gen: v6e
topology: v6e:2x2x1
jax: 0.10.0
libtpu: 0.0.40
codegen_flags: <defaults>
</compile_context>

<pallas_src>
import jax
import jax.numpy as jnp
from jax.experimental import pallas as pl
from jax.experimental.pallas import tpu as pltpu

_EPS = 1e-5


def _frozen_bn_kernel(w_ref, b_ref, rm_ref, rv_ref, x_ref, o_ref):
    # Param refs: (C_BLK, 1) f32 VMEM tiles for the current channel block.
    scale = w_ref[...] * jax.lax.rsqrt(rv_ref[...] + _EPS)     # (C_BLK, 1)
    shift = b_ref[...] - rm_ref[...] * scale                   # (C_BLK, 1)
    # x tile: (1, C_BLK, HW_pad). Compute in f32, single downcast on store
    # (keeps bf16 inputs dense on v5e where the VPU has no native bf16 ALU).
    x = x_ref[...].astype(jnp.float32)
    o_ref[...] = (x * scale[None] + shift[None]).astype(o_ref.dtype)


def _round_up(x, m):
    return -(-x // m) * m


def _choose_c_block(n, c, hw_pad, itemsize):
    """Pick the channel block: sublane-dense, ~2 MiB x-tiles, wide-enough grid."""
    sub = 8 if itemsize >= 4 else 16          # sublane packing granularity
    target_bytes = 2 * 1024 * 1024            # ~2 MiB tile -> ~8 MiB resident
    c_blk = (target_bytes // (hw_pad * itemsize)) // sub * sub
    c_blk = max(sub, min(c_blk, _round_up(c, sub)))
    # v7x megacore: keep the grid at >= ~8 steps when tiles would swallow it.
    while c_blk > sub and n * (-(-c // c_blk)) < 8:
        c_blk = max(sub, _round_up(c_blk // 2, sub))
    return c_blk


def frozen_batch_norm_2d(x, weight, bias, running_mean, running_var):
    """FrozenBatchNorm2d forward: y = (x - mean) * w / sqrt(var + eps) + b.

    x: (N, C, H, W); weight / bias / running_mean / running_var: (C,).
    """
    N, C, H, W = x.shape
    HW = H * W
    itemsize = jnp.dtype(x.dtype).itemsize

    hw_pad = _round_up(HW, 128)                       # lane-dense stores
    c_blk = _choose_c_block(N, C, hw_pad, itemsize)
    c_pad = _round_up(C, c_blk)                       # sublane-dense blocks

    x_flat = x.reshape(N, C, HW)
    if c_pad != C or hw_pad != HW:
        x_flat = jnp.pad(x_flat, ((0, 0), (0, c_pad - C), (0, hw_pad - HW)))

    def prep(p, fill=0.0):
        p = p.astype(jnp.float32)
        if c_pad != C:
            p = jnp.pad(p, (0, c_pad - C), constant_values=fill)
        return p.reshape(c_pad, 1)

    w_p, b_p = prep(weight), prep(bias)
    rm_p, rv_p = prep(running_mean), prep(running_var, fill=1.0)

    param_spec = pl.BlockSpec((c_blk, 1), lambda n, c: (c, 0))
    tile_spec = pl.BlockSpec((1, c_blk, hw_pad), lambda n, c: (n, c, 0))

    out_flat = pl.pallas_call(
        _frozen_bn_kernel,
        out_shape=jax.ShapeDtypeStruct((N, c_pad, hw_pad), x.dtype),
        grid_spec=pltpu.PrefetchScalarGridSpec(
            num_scalar_prefetch=0,
            grid=(N, c_pad // c_blk),
            in_specs=[param_spec, param_spec, param_spec, param_spec,
                      tile_spec],
            out_specs=tile_spec,
        ),
        compiler_params=pltpu.CompilerParams(
            dimension_semantics=("parallel", "parallel"),
            vmem_limit_bytes=48 * 1024 * 1024,   # safe on v7x's 64 MiB VMEM
        ),
    )(w_p, b_p, rm_p, rv_p, x_flat)

    return out_flat[:, :C, :HW].reshape(N, C, H, W)


if __name__ == "__main__":
    key = jax.random.PRNGKey(0)

    def reference(x, w, b, rm, rv):
        C = x.shape[1]
        scale = (w * jax.lax.rsqrt(rv + _EPS)).reshape(1, C, 1, 1)
        shift = b.reshape(1, C, 1, 1) - rm.reshape(1, C, 1, 1) * scale
        return x * scale + shift

    ok = True
    # Case 1: small demo shape (HW already lane-dense).
    # Case 2: late-ResNet-like 7x7 maps, exercising channel blocking and the
    #         HW-padding (49 -> 128) path.
    for (N, C, H, W) in [(2, 4, 16, 16), (2, 24, 7, 7)]:
        key, kx, kw, kb, km, kv = jax.random.split(key, 6)
        x = jax.random.normal(kx, (N, C, H, W), dtype=jnp.float32)
        w = 1.0 + 0.1 * jax.random.normal(kw, (C,), dtype=jnp.float32)
        b = 0.1 * jax.random.normal(kb, (C,), dtype=jnp.float32)
        rm = 0.1 * jax.random.normal(km, (C,), dtype=jnp.float32)
        rv = jnp.abs(1.0 + 0.1 * jax.random.normal(kv, (C,), dtype=jnp.float32))

        out = jax.block_until_ready(frozen_batch_norm_2d(x, w, b, rm, rv))
        ref = reference(x, w, b, rm, rv)
        ok = ok and (out.shape == x.shape)
        ok = ok and bool(jnp.allclose(out, ref, atol=1e-5, rtol=1e-5))

    assert ok
    print("KERNEL_OK")
</pallas_src>

<mosaic_0001>
module attributes {stable_mosaic.version = 11 : i64} {
  func.func @_frozen_bn_kernel(%arg0: i32, %arg1: i32, %arg2: memref<8x1xf32, #tpu.memory_space<vmem>>, %arg3: memref<8x1xf32, #tpu.memory_space<vmem>>, %arg4: memref<8x1xf32, #tpu.memory_space<vmem>>, %arg5: memref<8x1xf32, #tpu.memory_space<vmem>>, %arg6: memref<1x8x256xf32, #tpu.memory_space<vmem>>, %arg7: memref<1x8x256xf32, #tpu.memory_space<vmem>>) attributes {dimension_semantics = [#tpu.dimension_semantics<parallel>, #tpu.dimension_semantics<parallel>], iteration_bounds = array<i64: 2, 1>, scalar_prefetch = 0 : i64, scratch_operands = 0 : i64, tpu.core_type = #tpu.core_type<tc>, window_params = [{transform_indices = @transform_0, window_bounds = array<i64: 8, 1>}, {transform_indices = @transform_1, window_bounds = array<i64: 8, 1>}, {transform_indices = @transform_2, window_bounds = array<i64: 8, 1>}, {transform_indices = @transform_3, window_bounds = array<i64: 8, 1>}, {transform_indices = @transform_4, window_bounds = array<i64: 1, 8, 256>}, {transform_indices = @transform_5, window_bounds = array<i64: 1, 8, 256>}]} {
    %c0 = arith.constant 0 : index
    %c0_0 = arith.constant 0 : index
    %0 = vector.load %arg2[%c0, %c0_0] : memref<8x1xf32, #tpu.memory_space<vmem>>, vector<8x1xf32>
    %c0_1 = arith.constant 0 : index
    %c0_2 = arith.constant 0 : index
    %1 = vector.load %arg5[%c0_1, %c0_2] : memref<8x1xf32, #tpu.memory_space<vmem>>, vector<8x1xf32>
    %cst = arith.constant 9.99999974E-6 : f32
    %2 = vector.broadcast %cst : f32 to vector<8x1xf32>
    %3 = arith.addf %1, %2 : vector<8x1xf32>
    %4 = math.rsqrt %3 : vector<8x1xf32>
    %5 = arith.mulf %0, %4 : vector<8x1xf32>
    %c0_3 = arith.constant 0 : index
    %c0_4 = arith.constant 0 : index
    %6 = vector.load %arg3[%c0_3, %c0_4] : memref<8x1xf32, #tpu.memory_space<vmem>>, vector<8x1xf32>
    %c0_5 = arith.constant 0 : index
    %c0_6 = arith.constant 0 : index
    %7 = vector.load %arg4[%c0_5, %c0_6] : memref<8x1xf32, #tpu.memory_space<vmem>>, vector<8x1xf32>
    %8 = arith.mulf %7, %5 : vector<8x1xf32>
    %9 = arith.subf %6, %8 : vector<8x1xf32>
    %c0_7 = arith.constant 0 : index
    %c0_8 = arith.constant 0 : index
    %c0_9 = arith.constant 0 : index
    %10 = vector.load %arg6[%c0_7, %c0_8, %c0_9] : memref<1x8x256xf32, #tpu.memory_space<vmem>>, vector<1x8x256xf32>
    %11 = vector.shape_cast %5 : vector<8x1xf32> to vector<1x8x1xf32>
    %12 = vector.broadcast %11 : vector<1x8x1xf32> to vector<1x8x256xf32>
    %13 = arith.mulf %10, %12 : vector<1x8x256xf32>
    %14 = vector.shape_cast %9 : vector<8x1xf32> to vector<1x8x1xf32>
    %15 = vector.broadcast %14 : vector<1x8x1xf32> to vector<1x8x256xf32>
    %16 = arith.addf %13, %15 : vector<1x8x256xf32>
    %c0_10 = arith.constant 0 : index
    %c0_11 = arith.constant 0 : index
    %c0_12 = arith.constant 0 : index
    %17 = vector.load %arg7[%c0_10, %c0_11, %c0_12] : memref<1x8x256xf32, #tpu.memory_space<vmem>>, vector<1x8x256xf32>
    tpu.vector_store %arg7[%c0_10, %c0_11, %c0_12], %16 {strides = array<i32>} : memref<1x8x256xf32, #tpu.memory_space<vmem>>, vector<1x8x256xf32>,
    return
  }
  func.func @transform_0(%arg0: i32, %arg1: i32) -> (i32, i32) {
    %c0_i32 = arith.constant 0 : i32
    %c0_i32_0 = arith.constant 0 : i32
    return %arg1, %c0_i32 : i32, i32
  }
  func.func @transform_1(%arg0: i32, %arg1: i32) -> (i32, i32) {
    %c0_i32 = arith.constant 0 : i32
    %c0_i32_0 = arith.constant 0 : i32
    return %arg1, %c0_i32 : i32, i32
  }
  func.func @transform_2(%arg0: i32, %arg1: i32) -> (i32, i32) {
    %c0_i32 = arith.constant 0 : i32
    %c0_i32_0 = arith.constant 0 : i32
    return %arg1, %c0_i32 : i32, i32
  }
  func.func @transform_3(%arg0: i32, %arg1: i32) -> (i32, i32) {
    %c0_i32 = arith.constant 0 : i32
    %c0_i32_0 = arith.constant 0 : i32
    return %arg1, %c0_i32 : i32, i32
  }
  func.func @transform_4(%arg0: i32, %arg1: i32) -> (i32, i32, i32) {
    %c0_i32 = arith.constant 0 : i32
    %c0_i32_0 = arith.constant 0 : i32
    return %arg0, %arg1, %c0_i32 : i32, i32, i32
  }
  func.func @transform_5(%arg0: i32, %arg1: i32) -> (i32, i32, i32) {
    %c0_i32 = arith.constant 0 : i32
    %c0_i32_0 = arith.constant 0 : i32
    return %arg0, %arg1, %c0_i32 : i32, i32, i32
  }
}

</mosaic_0001>

<llo_original>
// kernel: tpu_custom_call.1
$region0: #{tpu_custom_call.1}
  #allocation0 [shape = 'u32[]', space=smem, size = 0x4, offset = 0x4, fixed_abs, tag = 'smem constant byte address 0x4 - core index']
  #allocation1 [shape = 'u32[144,128]{1,0:T(1,128)}', space=vmem, size = 0x12000, scoped, tag = 'internal scratch']
  %s0 = inlined_call_operand.vmem [shape: f32[8,1], index: 0, kind: input, shape index: {}]
  %s1 = inlined_call_operand.vmem [shape: f32[8,1], index: 1, kind: input, shape index: {}]
  %s2 = inlined_call_operand.vmem [shape: f32[8,1], index: 2, kind: input, shape index: {}]
  %s3 = inlined_call_operand.vmem [shape: f32[8,1], index: 3, kind: input, shape index: {}]
  %s4 = inlined_call_operand.vmem [shape: f32[2,8,256], index: 4, kind: input, shape index: {}]
  %s5 = inlined_call_operand.hbm [shape: f32[2,8,256], index: 5, kind: output, shape index: {}]
  %s6 = sld [smem:[#allocation0]]
  $region53: #{tpu_custom_call.1} parent=0
    _
  %s8 = ssub.s32 1, %s6
  %s9 = scalar_select 0, %s8, %s6
  $region1: #{tpu_custom_call.1} parent=0
    #allocation2 [shape = 'u8[16384]{0}', space=vmem, size = 0x4000, scoped, tag = 'output window, operand 0']
    #allocation3 [shape = 's32[2]{0}', space=sflag, size = 0x8, scoped, tag = 'scoped memory for tpu_custom_call.1']
    %10 = vsyncpa [#allocation3], 0
    %s11 = scalar_lea.sflag [#allocation3], 1
    %12 = vsyncpa %s11, 0
    loop: start=0, step=1, limit=4
    $region2: #{tpu_custom_call.1} parent=1 // loop_pre_header
      _
    $region3: #{tpu_custom_call.1} parent=1 // loop_header
      %s14 = sphi 0, %s18
      %p15 = scmp.ge.s32.totalorder %s14, 4
      %s21 = sphi 0, %s33
      %s22 = sphi 0, %s29
      %s23 = sphi 0, %s21
      %s24 = sphi 0, %s22
      %s25 = sphi 0, %s23
      %s26 = sphi 0, %s24
      %s36 = sphi 0, %s38
      %s39 = sphi 0, %s36
      %s40 = sphi 0, %s39
      %s56 = sphi 0, %s40
      %s62 = sphi 0, %s64
      %s65 = sphi 0, %s62
      %s66 = sphi 0, %s65
      %s82 = sphi 0, %s66
      %s88 = sphi 0, %s90
      %s91 = sphi 0, %s88
      %s92 = sphi 0, %s91
      %s108 = sphi 0, %s92
      %s114 = sphi 0, %s116
      %s117 = sphi 0, %s114
      %s118 = sphi 0, %s117
      %s134 = sphi 0, %s118
      %s142 = sphi 0, %s144
      %s145 = sphi 0, %s142
      %s146 = sphi 0, %s145
      %s162 = sphi 0, %s146
      %s170 = sphi 0, %s172
      %s173 = sphi 0, %s170
      %s174 = sphi 0, %s173
      %s190 = sphi 0, %s174
    $region4: #{tpu_custom_call.1} parent=1 // loop_header_branch
      %17 = sbr.rel (%p15) target = $region8
    $region5: #{tpu_custom_call.1} parent=1 // loop_body
      %s19 = ssub.s32 %s14, 1
      %s20 = ssub.s32 %s14, 2
      %s27 = sadd.s32 1, %s22
      %p28 = scmp.ge.s32.totalorder %s27, 1
      %s29 = scalar_select %p28, 0, %s27
      %s30 = sadd.s32 1, %s21
      %s31 = scalar_select %p28, %s30, %s21
      %p32 = scmp.ge.s32.totalorder %s31, 2
      %s33 = scalar_select %p32, 0, %s31
      %s34 = ssub.s32 %s22, %s29
      %p35 = scmp.eq.s32.totalorder %s34, 0
      %s37 = sadd.s32 %s36, 1
      %s38 = scalar_select %p35, %s36, %s37
      %p41 = pneg %p35
      %p42 = scmp.eq.s32.totalorder %s14, 1
      %p43 = por %p41, %p42
      %p44 = scmp.ne.s32.totalorder %s36, %s39
      %p45 = scmp.eq.s32.totalorder %s14, 0
      %p46 = por %p44, %p45
      %p47 = scmp.ne.s32.totalorder %s36, %s39
      %p48 = scmp.eq.s32.totalorder %s19, 1
      %p49 = por %p47, %p48
      %p50 = scmp.ne.s32.totalorder %s39, %s40
      %p51 = scmp.eq.s32.totalorder %s19, 0
      %p52 = por %p50, %p51
      %p53 = scmp.ne.s32.totalorder %s39, %s40
      %p54 = scmp.eq.s32.totalorder %s20, 1
      %p55 = por %p53, %p54
      %p57 = scmp.ne.s32.totalorder %s40, %s56
      %p58 = scmp.eq.s32.totalorder %s20, 0
      %p59 = por %p57, %p58
      %s60 = ssub.s32 %s22, %s29
      %p61 = scmp.eq.s32.totalorder %s60, 0
      %s63 = sadd.s32 %s62, 1
      %s64 = scalar_select %p61, %s62, %s63
      %p67 = pneg %p61
      %p68 = scmp.eq.s32.totalorder %s14, 1
      %p69 = por %p67, %p68
      %p70 = scmp.ne.s32.totalorder %s62, %s65
      %p71 = scmp.eq.s32.totalorder %s14, 0
      %p72 = por %p70, %p71
      %p73 = scmp.ne.s32.totalorder %s62, %s65
      %p74 = scmp.eq.s32.totalorder %s19, 1
      %p75 = por %p73, %p74
      %p76 = scmp.ne.s32.totalorder %s65, %s66
      %p77 = scmp.eq.s32.totalorder %s19, 0
      %p78 = por %p76, %p77
      %p79 = scmp.ne.s32.totalorder %s65, %s66
      %p80 = scmp.eq.s32.totalorder %s20, 1
      %p81 = por %p79, %p80
      %p83 = scmp.ne.s32.totalorder %s66, %s82
      %p84 = scmp.eq.s32.totalorder %s20, 0
      %p85 = por %p83, %p84
      %s86 = ssub.s32 %s22, %s29
      %p87 = scmp.eq.s32.totalorder %s86, 0
      %s89 = sadd.s32 %s88, 1
      %s90 = scalar_select %p87, %s88, %s89
      %p93 = pneg %p87
      %p94 = scmp.eq.s32.totalorder %s14, 1
      %p95 = por %p93, %p94
      %p96 = scmp.ne.s32.totalorder %s88, %s91
      %p97 = scmp.eq.s32.totalorder %s14, 0
      %p98 = por %p96, %p97
      %p99 = scmp.ne.s32.totalorder %s88, %s91
      %p100 = scmp.eq.s32.totalorder %s19, 1
      %p101 = por %p99, %p100
      %p102 = scmp.ne.s32.totalorder %s91, %s92
      %p103 = scmp.eq.s32.totalorder %s19, 0
      %p104 = por %p102, %p103
      %p105 = scmp.ne.s32.totalorder %s91, %s92
      %p106 = scmp.eq.s32.totalorder %s20, 1
      %p107 = por %p105, %p106
      %p109 = scmp.ne.s32.totalorder %s92, %s108
      %p110 = scmp.eq.s32.totalorder %s20, 0
      %p111 = por %p109, %p110
      %s112 = ssub.s32 %s22, %s29
      %p113 = scmp.eq.s32.totalorder %s112, 0
      %s115 = sadd.s32 %s114, 1
      %s116 = scalar_select %p113, %s114, %s115
      %p119 = pneg %p113
      %p120 = scmp.eq.s32.totalorder %s14, 1
      %p121 = por %p119, %p120
      %p122 = scmp.ne.s32.totalorder %s114, %s117
      %p123 = scmp.eq.s32.totalorder %s14, 0
      %p124 = por %p122, %p123
      %p125 = scmp.ne.s32.totalorder %s114, %s117
      %p126 = scmp.eq.s32.totalorder %s19, 1
      %p127 = por %p125, %p126
      %p128 = scmp.ne.s32.totalorder %s117, %s118
      %p129 = scmp.eq.s32.totalorder %s19, 0
      %p130 = por %p128, %p129
      %p131 = scmp.ne.s32.totalorder %s117, %s118
      %p132 = scmp.eq.s32.totalorder %s20, 1
      %p133 = por %p131, %p132
      %p135 = scmp.ne.s32.totalorder %s118, %s134
      %p136 = scmp.eq.s32.totalorder %s20, 0
      %p137 = por %p135, %p136
      %s138 = ssub.s32 %s21, %s33
      %s139 = ssub.s32 %s22, %s29
      %s140 = sor.u32 %s138, %s139
      %p141 = scmp.eq.s32.totalorder %s140, 0
      %s143 = sadd.s32 %s142, 1
      %s144 = scalar_select %p141, %s142, %s143
      %p147 = pneg %p141
      %p148 = scmp.eq.s32.totalorder %s14, 1
      %p149 = por %p147, %p148
      %p150 = scmp.ne.s32.totalorder %s142, %s145
      %p151 = scmp.eq.s32.totalorder %s14, 0
      %p152 = por %p150, %p151
      %p153 = scmp.ne.s32.totalorder %s142, %s145
      %p154 = scmp.eq.s32.totalorder %s19, 1
      %p155 = por %p153, %p154
      %p156 = scmp.ne.s32.totalorder %s145, %s146
      %p157 = scmp.eq.s32.totalorder %s19, 0
      %p158 = por %p156, %p157
      %p159 = scmp.ne.s32.totalorder %s145, %s146
      %p160 = scmp.eq.s32.totalorder %s20, 1
      %p161 = por %p159, %p160
      %p163 = scmp.ne.s32.totalorder %s146, %s162
      %p164 = scmp.eq.s32.totalorder %s20, 0
      %p165 = por %p163, %p164
      %s166 = ssub.s32 %s21, %s33
      %s167 = ssub.s32 %s22, %s29
      %s168 = sor.u32 %s166, %s167
      %p169 = scmp.eq.s32.totalorder %s168, 0
      %s171 = sadd.s32 %s170, 1
      %s172 = scalar_select %p169, %s170, %s171
      %p175 = pneg %p169
      %p176 = scmp.eq.s32.totalorder %s14, 1
      %p177 = por %p175, %p176
      %p178 = scmp.ne.s32.totalorder %s170, %s173
      %p179 = scmp.eq.s32.totalorder %s14, 0
      %p180 = por %p178, %p179
      %p181 = scmp.ne.s32.totalorder %s170, %s173
      %p182 = scmp.eq.s32.totalorder %s19, 1
      %p183 = por %p181, %p182
      %p184 = scmp.ne.s32.totalorder %s173, %s174
      %p185 = scmp.eq.s32.totalorder %s19, 0
      %p186 = por %p184, %p185
      %p187 = scmp.ne.s32.totalorder %s173, %s174
      %p188 = scmp.eq.s32.totalorder %s20, 1
      %p189 = por %p187, %p188
      %p191 = scmp.ne.s32.totalorder %s174, %s190
      %p192 = scmp.eq.s32.totalorder %s20, 0
      %p193 = por %p191, %p192
      %p194 = scmp.le.s32.totalorder 1, %s14
      %p195 = scmp.lt.s32.totalorder %s14, 3
      %p196 = pnand %p194, %p195
      %p197 = pneg %p196
      // Predicated region
      $region9: #{tpu_custom_call.1} parent=5 // pred_check
        _
      $region10: #{tpu_custom_call.1} parent=5 // pred_check_branch
        %199 = sbr.rel (%p196) target = $region12
      $region11: #{tpu_custom_call.1} parent=5 // pred_region
        %s200 = ssub.s32 %s14, 1
        // Predicated region
        $region13: #{tpu_custom_call.1} parent=11 // pred_check
          %p201 = pneg %p52
        $region14: #{tpu_custom_call.1} parent=11 // pred_check_branch
          %203 = sbr.rel (%p201) target = $region16
        $region15: #{tpu_custom_call.1} parent=11 // pred_region
          %p204 = scmp.lt.s32.totalorder %s24, 0
          %s205 = scalar_select %p204, %s24, 0
          %s206 = smul.addr %s205, 8
          %s207 = scalar_lea.vmem %s0, %s206
        $region16: #{tpu_custom_call.1} parent=11 // pred_fallthru
          _
        // Predicated region
        $region17: #{tpu_custom_call.1} parent=11 // pred_check
          %p208 = pneg %p78
        $region18: #{tpu_custom_call.1} parent=11 // pred_check_branch
          %210 = sbr.rel (%p208) target = $region20
        $region19: #{tpu_custom_call.1} parent=11 // pred_region
          %p211 = scmp.lt.s32.totalorder %s24, 0
          %s212 = scalar_select %p211, %s24, 0
          %s213 = smul.addr %s212, 8
          %s214 = scalar_lea.vmem %s1, %s213
        $region20: #{tpu_custom_call.1} parent=11 // pred_fallthru
          _
        // Predicated region
        $region21: #{tpu_custom_call.1} parent=11 // pred_check
          %p215 = pneg %p104
        $region22: #{tpu_custom_call.1} parent=11 // pred_check_branch
          %217 = sbr.rel (%p215) target = $region24
        $region23: #{tpu_custom_call.1} parent=11 // pred_region
          %p218 = scmp.lt.s32.totalorder %s24, 0
          %s219 = scalar_select %p218, %s24, 0
          %s220 = smul.addr %s219, 8
          %s221 = scalar_lea.vmem %s2, %s220
        $region24: #{tpu_custom_call.1} parent=11 // pred_fallthru
          _
        // Predicated region
        $region25: #{tpu_custom_call.1} parent=11 // pred_check
          %p222 = pneg %p130
        $region26: #{tpu_custom_call.1} parent=11 // pred_check_branch
          %224 = sbr.rel (%p222) target = $region28
        $region27: #{tpu_custom_call.1} parent=11 // pred_region
          %p225 = scmp.lt.s32.totalorder %s24, 0
          %s226 = scalar_select %p225, %s24, 0
          %s227 = smul.addr %s226, 8
          %s228 = scalar_lea.vmem %s3, %s227
        $region28: #{tpu_custom_call.1} parent=11 // pred_fallthru
          _
      $region12: #{tpu_custom_call.1} parent=5 // pred_fallthru
        _
      %p229 = scmp.lt.s32.totalorder %s14, 2
      // Predicated region
      $region29: #{tpu_custom_call.1} parent=5 // pred_check
        %p230 = pneg %p229
      $region30: #{tpu_custom_call.1} parent=5 // pred_check_branch
        %232 = sbr.rel (%p230) target = $region32
      $region31: #{tpu_custom_call.1} parent=5 // pred_region
        // Predicated region
        $region33: #{tpu_custom_call.1} parent=31 // pred_check
          %p233 = pneg %p152
        $region34: #{tpu_custom_call.1} parent=31 // pred_check_branch
          %235 = sbr.rel (%p233) target = $region36
        $region35: #{tpu_custom_call.1} parent=31 // pred_region
          %p236 = scmp.lt.s32.totalorder %s21, 1
          %s237 = scalar_select %p236, %s21, 1
          %p238 = scmp.lt.s32.totalorder %s22, 0
          %s239 = scalar_select %p238, %s22, 0
          %s240 = smul.addr %s239, 2
          %s241 = smul.addr %s237, 2
          %s242 = sadd.s32 %s240, %s241
          %s243 = smul.addr %s242, 8
          %s244 = scalar_lea.vmem %s4, %s243
        $region36: #{tpu_custom_call.1} parent=31 // pred_fallthru
          _
      $region32: #{tpu_custom_call.1} parent=5 // pred_fallthru
        _
      %p245 = scmp.le.s32.totalorder 1, %s14
      %p246 = scmp.lt.s32.totalorder %s14, 3
      %p247 = pnand %p245, %p246
      %p248 = pneg %p247
      // Predicated region
      $region37: #{tpu_custom_call.1} parent=5 // pred_check
        _
      $region38: #{tpu_custom_call.1} parent=5 // pred_check_branch
        %250 = sbr.rel (%p247) target = $region40
      $region39: #{tpu_custom_call.1} parent=5 // pred_region
        %s251 = ssub.s32 %s14, 1
        %p252 = scmp.lt.s32.totalorder %s24, 0
        %s253 = scalar_select %p252, %s24, 0
        %s254 = smul.addr %s253, 8
        %s255 = scalar_lea.vmem %s0, %s254
        %p256 = pneg %p52
        %p257 = pneg %p49
        %p258 = scmp.lt.s32.totalorder %s24, 0
        %s259 = scalar_select %p258, %s24, 0
        %s260 = smul.addr %s259, 8
        %s261 = scalar_lea.vmem %s1, %s260
        %p262 = pneg %p78
        %p263 = pneg %p75
        %p264 = scmp.lt.s32.totalorder %s24, 0
        %s265 = scalar_select %p264, %s24, 0
        %s266 = smul.addr %s265, 8
        %s267 = scalar_lea.vmem %s2, %s266
        %p268 = pneg %p104
        %p269 = pneg %p101
        %p270 = scmp.lt.s32.totalorder %s24, 0
        %s271 = scalar_select %p270, %s24, 0
        %s272 = smul.addr %s271, 8
        %s273 = scalar_lea.vmem %s3, %s272
        %p274 = pneg %p130
        %p275 = pneg %p127
        %p276 = scmp.lt.s32.totalorder %s23, 1
        %s277 = scalar_select %p276, %s23, 1
        %p278 = scmp.lt.s32.totalorder %s24, 0
        %s279 = scalar_select %p278, %s24, 0
        %s280 = smul.addr %s279, 2
        %s281 = smul.addr %s277, 2
        %s282 = sadd.s32 %s280, %s281
        %s283 = smul.addr %s282, 8
        %s284 = scalar_lea.vmem %s4, %s283
        %p285 = pneg %p158
        %p286 = pneg %p155
        %p287 = pneg %p186
        %p288 = pneg %p183
        %s289 = sand.u32 %s173, 1
        %s290 = scalar_lea.sflag [#allocation3], %s289
        %s291 = sand.u32 %s173, 1
        %s292 = smul.addr %s291, 16
        %s293 = scalar_lea.vmem [#allocation2], %s292
        %p294 = scmp.lt.s32.totalorder %s24, 0
        %s295 = scalar_select %p294, %s24, 0
        %s296 = smul.addr %s295, 8
        %s297 = scalar_lea.vmem %s0, %s296
        %p298 = scmp.lt.s32.totalorder %s24, 0
        %s299 = scalar_select %p298, %s24, 0
        %s300 = smul.addr %s299, 8
        %s301 = scalar_lea.vmem %s1, %s300
        %p302 = scmp.lt.s32.totalorder %s24, 0
        %s303 = scalar_select %p302, %s24, 0
        %s304 = smul.addr %s303, 8
        %s305 = scalar_lea.vmem %s2, %s304
        %p306 = scmp.lt.s32.totalorder %s24, 0
        %s307 = scalar_select %p306, %s24, 0
        %s308 = smul.addr %s307, 8
        %s309 = scalar_lea.vmem %s3, %s308
        %p310 = scmp.lt.s32.totalorder %s23, 1
        %s311 = scalar_select %p310, %s23, 1
        %p312 = scmp.lt.s32.totalorder %s24, 0
        %s313 = scalar_select %p312, %s24, 0
        %s314 = smul.addr %s313, 2
        %s315 = smul.addr %s311, 2
        %s316 = sadd.s32 %s314, %s315
        %s317 = smul.addr %s316, 8
        %s318 = scalar_lea.vmem %s4, %s317
        %v319 = vld [vmem:[%s297] sm:$0xff]
        %v320 = vld [vmem:[%s309] sm:$0xff]
        %v321 = vadd.f32 %v320, 1e-05
        %v322 = vrsqrt.pop %v321
        %v323 = vmul.f32 %v319, %v322
        %v324 = vld [vmem:[%s301] sm:$0xff]
        %v325 = vld [vmem:[%s305] sm:$0xff]
        %v326 = vmul.f32 %v325, %v323
        %v327 = vsub.f32 %v324, %v326
        %v328 = vld [vmem:[%s318] sm:$0xff]
        %v329 = vld [vmem:[%s318 + $0x8] sm:$0xff]
        %331 = vset.pattern.permute.xlu0 0
        %332 = vperm.xlu0 %331, %v323
        %v333 = vpop.permute.xlu0 %332
        %v335 = vmul.f32 %v328, %v333
        %v336 = vmul.f32 %v329, %v333
        %338 = vset.pattern.permute.xlu0 0
        %339 = vperm.xlu0 %338, %v327
        %v340 = vpop.permute.xlu0 %339
        %v342 = vadd.f32 %v335, %v340
        %v343 = vadd.f32 %v336, %v340
        %344 = vst [vmem:[%s293] sm:$0xff] %v342
        %345 = vst [vmem:[%s293 + $0x8] sm:$0xff] %v343
        %s346 = sand.u32 %s173, 1
        %s347 = scalar_lea.sflag [#allocation3], %s346
        %s348 = sand.u32 %s173, 1
        %s349 = smul.addr %s348, 16
        %s350 = scalar_lea.vmem [#allocation2], %s349
        // Predicated region
        $region41: #{tpu_custom_call.1} parent=39 // pred_check
          %p351 = pneg %p183
        $region42: #{tpu_custom_call.1} parent=39 // pred_check_branch
          %353 = sbr.rel (%p351) target = $region44
        $region43: #{tpu_custom_call.1} parent=39 // pred_region
          %s355 = ssub.s32 256, 256
          %356 = vsyncadd %s347, %s355
          %s357 = smul.addr %s24, 2
          %s358 = smul.addr %s23, 2
          %s359 = sadd.s32 %s357, %s358
          %s360 = smul.addr %s359, 128
          %s361 = scalar_lea.hbm %s5, %s360
          %s363 = sshll.u32 %s350, 4
          %s364 = int_to_ptr.vmem [resolvable:$true] %s363
          %366 = dma.vmem_to_hbm [thread:$0]  %s364, 256, %s361, %s347
        $region44: #{tpu_custom_call.1} parent=39 // pred_fallthru
          _
      $region40: #{tpu_custom_call.1} parent=5 // pred_fallthru
        _
      %p367 = scmp.le.s32.totalorder 2, %s14
      // Predicated region
      $region45: #{tpu_custom_call.1} parent=5 // pred_check
        %p368 = pneg %p367
      $region46: #{tpu_custom_call.1} parent=5 // pred_check_branch
        %370 = sbr.rel (%p368) target = $region48
      $region47: #{tpu_custom_call.1} parent=5 // pred_region
        %s371 = ssub.s32 %s14, 2
        // Predicated region
        $region49: #{tpu_custom_call.1} parent=47 // pred_check
          %p372 = pneg %p189
        $region50: #{tpu_custom_call.1} parent=47 // pred_check_branch
          %374 = sbr.rel (%p372) target = $region52
        $region51: #{tpu_custom_call.1} parent=47 // pred_region
          %s375 = sand.u32 %s174, 1
          %s376 = scalar_lea.sflag [#allocation3], %s375
          %s377 = sand.u32 %s174, 1
          %s378 = smul.addr %s377, 16
          %s379 = scalar_lea.vmem [#allocation2], %s378
          %380 = dma.done %s376, 256
        $region52: #{tpu_custom_call.1} parent=47 // pred_fallthru
          _
      $region48: #{tpu_custom_call.1} parent=5 // pred_fallthru
        _
    $region6: #{tpu_custom_call.1} parent=1 // loop_footer
      %s18 = sadd.s32 1, %s14
    $region7: #{tpu_custom_call.1} parent=1 // loop_footer_branch
      %13 = sbr.rel target = $region3
    $region8: #{tpu_custom_call.1} parent=1 // loop_exit
      _
    %381 = vsyncpa [#allocation3], 1
    %s382 = scalar_lea.sflag [#allocation3], 1
    %383 = vsyncpa %s382, 1

</llo_original>
